<compile_context>
chip_gen: v6e
topology: v6e:2x2x1
jax: 0.10.0
libtpu: 0.0.40
codegen_flags: <defaults>
</compile_context>

<pallas_src>
import jax
import jax.numpy as jnp
from jax.experimental import pallas as pl
from jax.experimental.pallas import tpu as pltpu

_CHUNK = 512  # lane-chunk for the in-kernel f32 reduction (bounds cast temps)


# ---------------------------------------------------------------------------
# Single-pass kernel: one (TB, C, HW) slab per grid step.
# ---------------------------------------------------------------------------
def _eca_kernel(w_ref, x_ref, o_ref):
    # w_ref: (4,) f32 in SMEM = [w0/HW, w1/HW, w2/HW, bias]
    # x_ref / o_ref: (TB, C, HW) VMEM tiles.
    tb, C, HW = x_ref.shape

    # Global average pool -> per-channel sums (f32 accumulation).  The 1/HW
    # normalization is folded into the conv taps by the wrapper.
    if x_ref.dtype == jnp.float32:
        s = jnp.sum(x_ref[...], axis=-1)                       # (TB, C)
    else:
        # Chunk the lane axis so the f32 cast temporary stays a few vregs per
        # step instead of a full f32 copy of the tile (matters for bf16 inputs).
        n_full = HW // _CHUNK
        s = jnp.zeros((tb, C), jnp.float32)
        if n_full > 0:
            def body(i, acc):
                off = pl.multiple_of(i * _CHUNK, _CHUNK)
                blk = x_ref[:, :, pl.ds(off, _CHUNK)].astype(jnp.float32)
                return acc + jnp.sum(blk, axis=-1)
            s = jax.lax.fori_loop(0, n_full, body, s)
        if HW % _CHUNK != 0:
            tail = x_ref[:, :, n_full * _CHUNK:HW].astype(jnp.float32)
            s = s + jnp.sum(tail, axis=-1)

    # Conv1d(kernel_size=3, padding=1) along channels: O(C) tap math on the tiny
    # pooled vector with zero-padded ends.  Kept as concat + static slices: it
    # is a few vregs of work; an XLU-roll variant saves <1us and is fragile for
    # small C, so it is intentionally not used.
    w0, w1, w2, bias = w_ref[0], w_ref[1], w_ref[2], w_ref[3]
    z = jnp.zeros((tb, 1), jnp.float32)
    sp = jnp.concatenate([z, s, z], axis=-1)                   # (TB, C + 2)
    conv = w0 * sp[:, 0:C] + w1 * sp[:, 1:C + 1] + w2 * sp[:, 2:C + 2] + bias
    gate = jax.nn.sigmoid(conv)                                # (TB, C) f32

    # Channel-wise rescale, streamed in the input dtype (no f32 working slab).
    o_ref[...] = (x_ref[...] * gate[:, :, None].astype(x_ref.dtype)).astype(o_ref.dtype)


# ---------------------------------------------------------------------------
# Generation-aware sizing helpers.
# ---------------------------------------------------------------------------
def _tpu_info():
    """(physical VMEM bytes per core, TensorCores per chip), with safe fallbacks."""
    vmem_cap = 64 << 20            # conservative (v7x-sized) if the query fails
    cores = 1
    try:
        info = pltpu.get_tpu_info()
        cap = getattr(info, "vmem_capacity_bytes", None)
        if cap:
            vmem_cap = int(cap)
        nc = (getattr(info, "num_cores", None)
              or getattr(info, "tensorcores_per_chip", None)
              or getattr(info, "core_count", None))
        if nc:
            cores = int(nc)
    except Exception:
        pass
    try:
        kind = jax.devices()[0].device_kind.lower()
        if "v7" in kind or "tpu7" in kind:
            cores = max(cores, 2)
    except Exception:
        pass
    return vmem_cap, cores


def _pick_batch_tile(B, per_batch_bytes, budget_bytes, num_cores):
    """Largest batch tile whose per-step VMEM peak fits the budget.  On
    multi-TensorCore chips keep at least `num_cores` grid steps and prefer a
    step count that splits evenly across cores; on single-core chips a small
    batch may run as one big step."""
    fit = max(1, budget_bytes // max(per_batch_bytes, 1))
    tb = max(1, min(B, fit))
    if num_cores > 1 and B > 1:
        tb = min(tb, max(1, B // num_cores))
        while tb > 1 and pl.cdiv(B, tb) % num_cores != 0:
            tb -= 1
    return tb


def _vmem_limit(need_bytes, vmem_cap):
    hi = (5 * vmem_cap) // 8
    lo = min(32 << 20, hi)
    return int(min(max(need_bytes, lo), hi))


# ---------------------------------------------------------------------------
# Two-pass fallback: reduce over HW tiles, then re-stream and rescale.
# ---------------------------------------------------------------------------
def _eca_two_pass(x_flat, wb, H, W, peak_budget, vmem_cap):
    B, C, HW = x_flat.shape
    dtype = x_flat.dtype
    item = dtype.itemsize

    # Spatial tile: largest 128-multiple of lanes whose per-step peak
    # (in+out double buffers + possible f32 cast temp) fits the budget.
    col_bytes = C * (4 * item + (4 if item < 4 else 0))
    lanes = max(128, (peak_budget // max(col_bytes, 1)) // 128 * 128)
    THW = int(min(lanes, pl.cdiv(HW, 128) * 128))
    n_hw = pl.cdiv(HW, THW)
    ragged = (HW % THW) != 0
    limit = _vmem_limit(THW * col_bytes + (2 << 20), vmem_cap)
    # TODO(synk): also tile the channel axis when C alone is so large that a
    # single (C, 128) column exceeds the VMEM budget.

    # Pass 1: per-(batch, channel) spatial sums accumulated across HW tiles.
    def sum_kernel(x_ref, s_ref):
        h = pl.program_id(1)

        @pl.when(h == 0)
        def _():
            s_ref[...] = jnp.zeros_like(s_ref)

        xt = x_ref[...].astype(jnp.float32)                    # (1, C, THW)
        if ragged:
            lane = jax.lax.broadcasted_iota(jnp.int32, xt.shape, 2)
            xt = jnp.where(h * THW + lane < HW, xt, 0.0)       # mask stale tail
        s_ref[...] += jnp.sum(xt, axis=-1, keepdims=True)

    sums = pl.pallas_call(
        sum_kernel,
        out_shape=jax.ShapeDtypeStruct((B, C, 1), jnp.float32),
        grid=(B, n_hw),
        in_specs=[pl.BlockSpec((1, C, THW), lambda b, h: (b, 0, h))],
        out_specs=pl.BlockSpec((1, C, 1), lambda b, h: (b, 0, 0)),
        compiler_params=pltpu.CompilerParams(
            dimension_semantics=("parallel", "arbitrary"),
            vmem_limit_bytes=limit),
    )(x_flat)

    # Gate on the tiny pooled vector in plain JAX (O(B*C)); wb folds 1/HW.
    s = sums[:, :, 0]                                          # (B, C)
    sp = jnp.pad(s, ((0, 0), (1, 1)))
    conv = wb[0] * sp[:, :-2] + wb[1] * sp[:, 1:-1] + wb[2] * sp[:, 2:] + wb[3]
    gate = jax.nn.sigmoid(conv)[:, :, None]                    # (B, C, 1) f32

    # Pass 2: re-stream x tiles and apply the per-channel gate.
    def scale_kernel(g_ref, x_ref, o_ref):
        g = g_ref[...].astype(x_ref.dtype)                     # (1, C, 1)
        o_ref[...] = (x_ref[...] * g).astype(o_ref.dtype)

    out = pl.pallas_call(
        scale_kernel,
        out_shape=jax.ShapeDtypeStruct((B, C, HW), dtype),
        grid=(B, n_hw),
        in_specs=[
            pl.BlockSpec((1, C, 1), lambda b, h: (b, 0, 0)),
            pl.BlockSpec((1, C, THW), lambda b, h: (b, 0, h)),
        ],
        out_specs=pl.BlockSpec((1, C, THW), lambda b, h: (b, 0, h)),
        compiler_params=pltpu.CompilerParams(
            dimension_semantics=("parallel", "arbitrary"),
            vmem_limit_bytes=limit),
    )(gate, x_flat)

    return out.reshape(B, C, H, W)


# ---------------------------------------------------------------------------
# Public wrapper.
# ---------------------------------------------------------------------------
def eca_attention(x, conv_w, conv_b, *, batch_tile=None, vmem_budget_bytes=None):
    """ECA forward.  x: (B, C, H, W); conv_w: (1, 1, 3); conv_b: (1,)."""
    B, C, H, W = x.shape
    HW = H * W
    x_flat = x.reshape(B, C, HW)                  # free view; NO spatial padding
    itemsize = x_flat.dtype.itemsize

    # Fold 1/HW into the taps; pack [w0, w1, w2, bias] as an SMEM scalar vector.
    taps = conv_w.reshape(-1).astype(jnp.float32) / jnp.float32(HW)
    wb = jnp.concatenate([taps, conv_b.reshape(-1).astype(jnp.float32)])

    vmem_cap, num_cores = _tpu_info()
    if vmem_budget_bytes is None:
        # ~5/8 of physical VMEM for pipeline buffers + temps:
        # v5e/v6e ~80 MiB of 128, v7x ~40 MiB of 64; headroom for the compiler.
        vmem_budget_bytes = (5 * vmem_cap) // 8
    peak_budget = vmem_budget_bytes - min(2 << 20, vmem_budget_bytes // 2)

    slab = C * HW * itemsize                      # bytes per batch element
    red_tmp = 0 if x_flat.dtype == jnp.float32 else C * min(HW, _CHUNK) * 4
    per_batch = 4 * slab + red_tmp                # in+out double-buffered + temp

    if batch_tile is None and per_batch > peak_budget:
        # A single batch element does not fit: two-pass fallback tiled over HW.
        return _eca_two_pass(x_flat, wb, H, W, peak_budget, vmem_cap)

    TB = batch_tile if batch_tile is not None else _pick_batch_tile(
        B, per_batch, peak_budget, num_cores)
    steps = pl.cdiv(B, TB)                        # TB need not divide B
    need = TB * per_batch + (2 << 20)

    out = pl.pallas_call(
        _eca_kernel,
        out_shape=jax.ShapeDtypeStruct((B, C, HW), x.dtype),
        grid=(steps,),
        in_specs=[
            pl.BlockSpec(memory_space=pltpu.MemorySpace.SMEM),    # taps + bias
            pl.BlockSpec((TB, C, HW), lambda bi: (bi, 0, 0)),     # x slab
        ],
        out_specs=pl.BlockSpec((TB, C, HW), lambda bi: (bi, 0, 0)),
        compiler_params=pltpu.CompilerParams(
            dimension_semantics=("parallel",),
            vmem_limit_bytes=_vmem_limit(need, vmem_cap)),
    )(wb, x_flat)

    return out.reshape(B, C, H, W)                # free view


def eca_reference(x, conv_w, conv_b):
    """Pure-JAX (f32) reference matching the PyTorch forward."""
    xf = x.astype(jnp.float32)
    y = jnp.mean(xf, axis=(2, 3))                 # (B, C)
    yp = jnp.pad(y, ((0, 0), (1, 1)))             # zero-pad channel ends
    w = conv_w.reshape(-1).astype(jnp.float32)
    conv = w[0] * yp[:, :-2] + w[1] * yp[:, 1:-1] + w[2] * yp[:, 2:] + conv_b[0]
    gate = jax.nn.sigmoid(conv)
    return xf * gate[:, :, None, None]


if __name__ == "__main__":
    key = jax.random.PRNGKey(0)
    kx, kw, kb, kx2 = jax.random.split(key, 4)

    # Deterministic Conv1d(1, 1, kernel_size=3) parameters (PyTorch init bound).
    bound = 1.0 / jnp.sqrt(3.0)
    conv_w = jax.random.uniform(kw, (1, 1, 3), minval=-bound, maxval=bound,
                                dtype=jnp.float32)
    conv_b = jax.random.uniform(kb, (1,), minval=-bound, maxval=bound,
                                dtype=jnp.float32)

    # 1) Main single-pass path; HW = 24*24 = 576 is NOT a multiple of 128
    #    (exercises the no-padding, masked-tail-store path).
    B, C, H, W = 2, 8, 24, 24
    x = jax.random.normal(kx, (B, C, H, W), dtype=jnp.float32)
    out = jax.block_until_ready(eca_attention(x, conv_w, conv_b))
    ref = eca_reference(x, conv_w, conv_b)
    assert out.shape == x.shape
    assert jnp.allclose(out, ref, atol=1e-5, rtol=1e-5), "main path mismatch"

    # 2) Ragged batch tiling (TB does not divide B).
    x3 = jax.random.normal(kx2, (3, C, H, W), dtype=jnp.float32)
    out3 = jax.block_until_ready(eca_attention(x3, conv_w, conv_b, batch_tile=2))
    ref3 = eca_reference(x3, conv_w, conv_b)
    assert jnp.allclose(out3, ref3, atol=1e-5, rtol=1e-5), "ragged batch mismatch"

    # 3) Two-pass fallback (forced tiny VMEM budget) with ragged HW tiles.
    out_fb = jax.block_until_ready(
        eca_attention(x3, conv_w, conv_b, vmem_budget_bytes=1 << 10))
    assert jnp.allclose(out_fb, ref3, atol=1e-5, rtol=1e-5), "two-pass mismatch"

    # 4) bf16 input through the chunked f32-accumulation path.
    xb = x.astype(jnp.bfloat16)
    out_b = jax.block_until_ready(eca_attention(xb, conv_w, conv_b))
    ref_b = eca_reference(xb, conv_w, conv_b)
    assert jnp.allclose(out_b.astype(jnp.float32), ref_b, atol=5e-2, rtol=5e-2), \
        "bf16 path mismatch"

    print("KERNEL_OK")
</pallas_src>

<mosaic_0001>
module attributes {stable_mosaic.version = 11 : i64} {
  func.func @_eca_kernel(%arg0: i32, %arg1: memref<4xf32, #tpu.memory_space<smem>>, %arg2: memref<2x8x576xf32, #tpu.memory_space<vmem>>, %arg3: memref<2x8x576xf32, #tpu.memory_space<vmem>>) attributes {dimension_semantics = [#tpu.dimension_semantics<parallel>], iteration_bounds = array<i64: 1>, scalar_prefetch = 0 : i64, scratch_operands = 0 : i64, tpu.core_type = #tpu.core_type<tc>, window_params = [{transform_indices = @transform_0, window_bounds = array<i64: 4>}, {transform_indices = @transform_1, window_bounds = array<i64: 2, 8, 576>}, {transform_indices = @transform_2, window_bounds = array<i64: 2, 8, 576>}]} {
    %c0 = arith.constant 0 : index
    %c0_0 = arith.constant 0 : index
    %c0_1 = arith.constant 0 : index
    %0 = vector.load %arg2[%c0, %c0_0, %c0_1] : memref<2x8x576xf32, #tpu.memory_space<vmem>>, vector<2x8x576xf32>
    %cst = arith.constant dense<0.000000e+00> : vector<2x8xf32>
    %1 = vector.multi_reduction <add>, %0, %cst [2] : vector<2x8x576xf32> to vector<2x8xf32>
    %c0_2 = arith.constant 0 : index
    %2 = memref.load %arg1[%c0_2] : memref<4xf32, #tpu.memory_space<smem>>
    %c1 = arith.constant 1 : index
    %3 = memref.load %arg1[%c1] : memref<4xf32, #tpu.memory_space<smem>>
    %c2 = arith.constant 2 : index
    %4 = memref.load %arg1[%c2] : memref<4xf32, #tpu.memory_space<smem>>
    %c3 = arith.constant 3 : index
    %5 = memref.load %arg1[%c3] : memref<4xf32, #tpu.memory_space<smem>>
    %cst_3 = arith.constant 0.000000e+00 : f32
    %6 = vector.broadcast %cst_3 : f32 to vector<2x1xf32>
    %7 = tpu.concatenate %6, %1, %6 in 1 : vector<2x1xf32>, vector<2x8xf32>, vector<2x1xf32> -> vector<2x10xf32>
    %8 = vector.extract_strided_slice %7 {offsets = [0, 0], sizes = [2, 8], strides = [1, 1]} : vector<2x10xf32> to vector<2x8xf32>
    %9 = vector.broadcast %2 : f32 to vector<2x8xf32>
    %10 = arith.mulf %9, %8 : vector<2x8xf32>
    %11 = vector.extract_strided_slice %7 {offsets = [0, 1], sizes = [2, 8], strides = [1, 1]} : vector<2x10xf32> to vector<2x8xf32>
    %12 = vector.broadcast %3 : f32 to vector<2x8xf32>
    %13 = arith.mulf %12, %11 : vector<2x8xf32>
    %14 = arith.addf %10, %13 : vector<2x8xf32>
    %15 = vector.extract_strided_slice %7 {offsets = [0, 2], sizes = [2, 8], strides = [1, 1]} : vector<2x10xf32> to vector<2x8xf32>
    %16 = vector.broadcast %4 : f32 to vector<2x8xf32>
    %17 = arith.mulf %16, %15 : vector<2x8xf32>
    %18 = arith.addf %14, %17 : vector<2x8xf32>
    %19 = vector.broadcast %5 : f32 to vector<2x8xf32>
    %20 = arith.addf %18, %19 : vector<2x8xf32>
    %21 = arith.negf %20 : vector<2x8xf32>
    %22 = math.exp %21 : vector<2x8xf32>
    %cst_4 = arith.constant 1.000000e+00 : f32
    %23 = vector.broadcast %cst_4 : f32 to vector<2x8xf32>
    %24 = arith.addf %23, %22 : vector<2x8xf32>
    %25 = arith.divf %23, %24 : vector<2x8xf32>
    %c0_5 = arith.constant 0 : index
    %c0_6 = arith.constant 0 : index
    %c0_7 = arith.constant 0 : index
    %26 = vector.load %arg2[%c0_5, %c0_6, %c0_7] : memref<2x8x576xf32, #tpu.memory_space<vmem>>, vector<2x8x576xf32>
    %27 = vector.shape_cast %25 : vector<2x8xf32> to vector<2x8x1xf32>
    %28 = vector.broadcast %27 : vector<2x8x1xf32> to vector<2x8x576xf32>
    %29 = arith.mulf %26, %28 : vector<2x8x576xf32>
    %c0_8 = arith.constant 0 : index
    %c0_9 = arith.constant 0 : index
    %c0_10 = arith.constant 0 : index
    %30 = vector.load %arg3[%c0_8, %c0_9, %c0_10] : memref<2x8x576xf32, #tpu.memory_space<vmem>>, vector<2x8x576xf32>
    tpu.vector_store %arg3[%c0_8, %c0_9, %c0_10], %29 {strides = array<i32>} : memref<2x8x576xf32, #tpu.memory_space<vmem>>, vector<2x8x576xf32>,
    return
  }
  func.func @transform_0(%arg0: i32) -> i32 {
    %c0_i32 = arith.constant 0 : i32
    %c0_i32_0 = arith.constant 0 : i32
    return %c0_i32 : i32
  }
  func.func @transform_1(%arg0: i32) -> (i32, i32, i32) {
    %c0_i32 = arith.constant 0 : i32
    %c0_i32_0 = arith.constant 0 : i32
    %c0_i32_1 = arith.constant 0 : i32
    return %arg0, %c0_i32, %c0_i32_0 : i32, i32, i32
  }
  func.func @transform_2(%arg0: i32) -> (i32, i32, i32) {
    %c0_i32 = arith.constant 0 : i32
    %c0_i32_0 = arith.constant 0 : i32
    %c0_i32_1 = arith.constant 0 : i32
    return %arg0, %c0_i32, %c0_i32_0 : i32, i32, i32
  }
}

</mosaic_0001>

<llo_original>
// kernel: tpu_custom_call.1
$region0: #{tpu_custom_call.1}
  #allocation0 [shape = 'u32[]', space=smem, size = 0x4, offset = 0x4, fixed_abs, tag = 'smem constant byte address 0x4 - core index']
  #allocation1 [shape = 'u32[144,128]{1,0:T(1,128)}', space=vmem, size = 0x12000, scoped, tag = 'internal scratch']
  %s0 = inlined_call_operand.hbm [shape: f32[4], index: 0, kind: input, shape index: {}]
  %s1 = inlined_call_operand.hbm [shape: f32[2,8,576], index: 1, kind: input, shape index: {}]
  %s2 = inlined_call_operand.hbm [shape: f32[2,8,576], index: 2, kind: output, shape index: {}]
  %s3 = sld [smem:[#allocation0]]
  $region26: #{tpu_custom_call.1} parent=0
    _
  %s5 = ssub.s32 1, %s3
  %s6 = scalar_select 0, %s5, %s3
  $region1: #{tpu_custom_call.1} parent=0
    #allocation2 [shape = 'u8[512]{0}', space=smem, size = 0x200, scoped, tag = 'input window, operand 0, single buffered']
    #allocation3 [shape = 's32[1]{0}', space=sflag, size = 0x4, scoped, tag = 'scoped memory for tpu_custom_call.1']
    #allocation4 [shape = 's32[1]{0}', space=sflag, size = 0x4, scoped, tag = 'scoped memory for tpu_custom_call.1']
    #allocation5 [shape = 's32[1]{0}', space=sflag, size = 0x4, scoped, tag = 'scoped memory for tpu_custom_call.1']
    #allocation6 [shape = 'u8[40960]{0}', space=vmem, size = 0xa000, scoped, tag = 'input window, operand 1, single buffered']
    #allocation7 [shape = 'u8[40960]{0}', space=vmem, size = 0xa000, scoped, tag = 'output window, operand 0, single buffered']
    %7 = vsyncpa [#allocation5], 0
    %8 = vsyncpa [#allocation3], 0
    %9 = vsyncpa [#allocation4], 0
    // Predicated region
    $region2: #{tpu_custom_call.1} parent=1 // pred_check
      _
    $region3: #{tpu_custom_call.1} parent=1 // pred_check_branch
      %11 = sbr.rel (0) target = $region5
    $region4: #{tpu_custom_call.1} parent=1 // pred_region
      %s13 = ssub.s32 16, 16
      %14 = vsyncadd [#allocation5], %s13
      %17 = dma.hbm_to_smem %s0, 16, [#allocation2], [#allocation5]
    $region5: #{tpu_custom_call.1} parent=1 // pred_fallthru
      _
    // Predicated region
    $region6: #{tpu_custom_call.1} parent=1 // pred_check
      _
    $region7: #{tpu_custom_call.1} parent=1 // pred_check_branch
      %19 = sbr.rel (0) target = $region9
    $region8: #{tpu_custom_call.1} parent=1 // pred_region
      %s21 = ssub.s32 1280, 1280
      %22 = vsyncadd [#allocation3], %s21
      %s23 = sshll.u32 [#allocation6], 4
      %s24 = int_to_ptr.vmem [resolvable:$true] %s23
      %29 = dma.hbm_to_vmem [thread:$0]  %s1, 1280, %s24, [#allocation3], 640, 640, 40
    $region9: #{tpu_custom_call.1} parent=1 // pred_fallthru
      _
    // Predicated region
    $region10: #{tpu_custom_call.1} parent=1 // pred_check
      _
    $region11: #{tpu_custom_call.1} parent=1 // pred_check_branch
      %31 = sbr.rel (0) target = $region13
    $region12: #{tpu_custom_call.1} parent=1 // pred_region
      %32 = dma.done [#allocation5], 16
    $region13: #{tpu_custom_call.1} parent=1 // pred_fallthru
      _
    // Predicated region
    $region14: #{tpu_custom_call.1} parent=1 // pred_check
      _
    $region15: #{tpu_custom_call.1} parent=1 // pred_check_branch
      %34 = sbr.rel (0) target = $region17
    $region16: #{tpu_custom_call.1} parent=1 // pred_region
      %35 = dma.done [#allocation3], 1280
    $region17: #{tpu_custom_call.1} parent=1 // pred_fallthru
      _
    %36 = sfence
    %v37 = vld [vmem:[#allocation6] sm:$0xff]
    %v38 = vld [vmem:[#allocation6 + $0x8] sm:$0xff]
    %v39 = vld [vmem:[#allocation6 + $0x10] sm:$0xff]
    %v40 = vld [vmem:[#allocation6 + $0x18] sm:$0xff]
    %v41 = vld [vmem:[#allocation6 + $0x20] sm:$0xff]
    %v42 = vld [vmem:[#allocation6 + $0x28] sm:$0xff]
    %v43 = vld [vmem:[#allocation6 + $0x30] sm:$0xff]
    %v44 = vld [vmem:[#allocation6 + $0x38] sm:$0xff]
    %v45 = vld [vmem:[#allocation6 + $0x40] sm:$0xff]
    %v46 = vld [vmem:[#allocation6 + $0x48] sm:$0xff]
    %v47 = vadd.f32 %v37, %v38
    %v48 = vadd.f32 %v47, %v39
    %v49 = vadd.f32 %v48, %v40
    %vm50 = vcmask 523264
    %v51 = vsel %vm50, %v41, 0.0
    %v52 = vadd.f32 %v49, %v51
    %53 = vadd.xlane.f32.xlu0 %v52
    %v54 = vpop.xlane.xlu0 %53
    %v55 = vadd.f32 %v42, %v43
    %v56 = vadd.f32 %v55, %v44
    %v57 = vadd.f32 %v56, %v45
    %v58 = vsel %vm50, %v46, 0.0
    %v59 = vadd.f32 %v57, %v58
    %60 = vadd.xlane.f32.xlu0 %v59
    %v61 = vpop.xlane.xlu0 %60
    %s62 = sld [smem:[#allocation2]]
    %s63 = sld [smem:[#allocation2 + $0x1]]
    %s64 = sld [smem:[#allocation2 + $0x2]]
    %s65 = sld [smem:[#allocation2 + $0x3]]
    %v68 = vlaneseq
    %v69 = vand.u32 %v68, 127
    %v70 = vadd.s32 %v69, 4294967295
    %v71 = vlaneseq
    %v72 = vshrl.u32 %v71, 7
    %v73 = vsub.s32 %v70, %v72
    %v74 = vrot.slane %v54, %v73
    %v75 = vlaneseq
    %v76 = vshrl.u32 %v75, 7
    %v77 = vsub.s32 %v70, %v76
    %v78 = vrot.slane %v61, %v77
    %vm79 = vcmask 1041409
    %v80 = vsel %vm79, %v78, %v74
    %vm82 = vcmask 7168
    %v83 = vsel %vm82, 0.0, %v80
    %vm84 = vcmask 72704
    %v85 = vsel %vm84, %v83, 0.0
    %v86 = vstv %s62
    %v87 = vmul.f32 %v86, %v85
    %v88 = vstv %s63
    %v89 = vmul.f32 %v88, %v85
    %91 = vrot.lane.b32.xlu0 %v89, 127
    %v92 = vpop.permute.xlu0 %91
    %v94 = vadd.f32 %v87, %v92
    %v95 = vstv %s64
    %v96 = vmul.f32 %v95, %v85
    %98 = vrot.lane.b32.xlu0 %v96, 126
    %v99 = vpop.permute.xlu0 %98
    %v101 = vadd.f32 %v94, %v99
    %v102 = vstv %s65
    %v103 = vadd.f32 %v101, %v102
    %v104 = vxor.u32 %v103, 2147483648
    %v105 = vmul.f32 %v104, 1.442695
    %v106 = vpow.pop %v105
    %v107 = vadd.f32 %v106, 1.0
    %v108 = vrcp.pop %v107
    %v109 = vmul.f32 1.0, %v108
    %v110 = vlaneseq
    %v111 = vshrl.u32 %v110, 7
    %v112 = vsub.s32 0, %v111
    %v113 = vrot.slane %v109, %v112
    %115 = vbcast.lane.b32.xlu0 %v113, 256
    %v116 = vpop.permute.xlu0 %115
    %v117 = vlaneseq
    %v118 = vshrl.u32 %v117, 7
    %v119 = vsub.s32 1, %v118
    %v120 = vrot.slane %v109, %v119
    %122 = vbcast.lane.b32.xlu0 %v120, 256
    %v123 = vpop.permute.xlu0 %122
    %v124 = vmul.f32 %v37, %v116
    %v125 = vmul.f32 %v38, %v116
    %v126 = vmul.f32 %v39, %v116
    %v127 = vmul.f32 %v40, %v116
    %v128 = vmul.f32 %v41, %v116
    %v129 = vmul.f32 %v42, %v123
    %v130 = vmul.f32 %v43, %v123
    %v131 = vmul.f32 %v44, %v123
    %v132 = vmul.f32 %v45, %v123
    %v133 = vmul.f32 %v46, %v123
    %134 = vst [vmem:[#allocation7] sm:$0xff] %v124
    %135 = vst [vmem:[#allocation7 + $0x8] sm:$0xff] %v125
    %136 = vst [vmem:[#allocation7 + $0x10] sm:$0xff] %v126
    %137 = vst [vmem:[#allocation7 + $0x18] sm:$0xff] %v127
    %138 = vst.msk [vmem:[#allocation7 + $0x20] sm:$0xff] %vm50, %v128
    %139 = vst [vmem:[#allocation7 + $0x28] sm:$0xff] %v129
    %140 = vst [vmem:[#allocation7 + $0x30] sm:$0xff] %v130
    %141 = vst [vmem:[#allocation7 + $0x38] sm:$0xff] %v131
    %142 = vst [vmem:[#allocation7 + $0x40] sm:$0xff] %v132
    %143 = vst.msk [vmem:[#allocation7 + $0x48] sm:$0xff] %vm50, %v133
    // Predicated region
    $region18: #{tpu_custom_call.1} parent=1 // pred_check
      _
    $region19: #{tpu_custom_call.1} parent=1 // pred_check_branch
      %145 = sbr.rel (0) target = $region21
    $region20: #{tpu_custom_call.1} parent=1 // pred_region
      %s147 = ssub.s32 1280, 1280
      %148 = vsyncadd [#allocation4], %s147
      %s149 = sshll.u32 [#allocation7], 4
      %s150 = int_to_ptr.vmem [resolvable:$true] %s149
      %155 = dma.vmem_to_hbm [thread:$0]  %s150, 1280, %s2, [#allocation4], 640, 640, 40
    $region21: #{tpu_custom_call.1} parent=1 // pred_fallthru
      _
    // Predicated region
    $region22: #{tpu_custom_call.1} parent=1 // pred_check
      _
    $region23: #{tpu_custom_call.1} parent=1 // pred_check_branch
      %157 = sbr.rel (0) target = $region25
    $region24: #{tpu_custom_call.1} parent=1 // pred_region
      %158 = dma.done [#allocation4], 1280
    $region25: #{tpu_custom_call.1} parent=1 // pred_fallthru
      _
    %159 = vsyncpa [#allocation3], 1
    %160 = vsyncpa [#allocation4], 1
    %161 = vsyncpa [#allocation5], 1

</llo_original>
